<compile_context>
chip_gen: v7x
topology: tpu7x:2x2x1
jax: 0.10.0
libtpu: 0.0.40
codegen_flags: <defaults>
</compile_context>

<pallas_src>
import itertools

import numpy as np
import jax
import jax.numpy as jnp
from jax.experimental import pallas as pl
from jax.experimental.pallas import tpu as pltpu


def _round_up(x, m):
    return ((x + m - 1) // m) * m


class RelationModuleMultiScaleWithClassifier:
    """JAX/Pallas re-implementation of the PyTorch module's forward pass (eval mode)."""

    def __init__(self, img_feature_dim, num_frames, num_class, key):
        self.subsample_num = 3
        self.img_feature_dim = img_feature_dim
        self.scales = list(range(num_frames, 1, -1))
        self.relations_scales = []
        self.subsample_scales = []
        for scale in self.scales:
            rel = list(itertools.combinations(range(num_frames), scale))
            self.relations_scales.append(rel)
            self.subsample_scales.append(min(self.subsample_num, len(rel)))
        self.num_class = num_class
        self.num_frames = num_frames
        self.num_bottleneck = 256

        D, T, NB, C = img_feature_dim, num_frames, self.num_bottleneck, num_class
        S = len(self.scales)
        self.num_scales = S
        # relations actually evaluated per forward: scale[0]'s single full relation + <=3 per smaller scale
        self.counts = list(self.subsample_scales)            # counts[0] == 1
        self.P = max(self.counts)                             # relations stacked along M per grid step
        self.half = (S + 1) // 2                              # scale groups per TensorCore half
        self.S_pad = 2 * self.half                            # scale axis padded to an even 2-way split
        self.K_pad = _round_up(T * D, 128)
        self.C_pad = _round_up(max(C, 128), 128)

        # Deterministic synthetic params, one head per scale; stacked + zero-padded for the fused kernel.
        w1 = np.zeros((self.S_pad, self.K_pad, NB), np.float32)
        b1 = np.zeros((self.S_pad, 1, NB), np.float32)
        w2 = np.zeros((self.S_pad, NB, NB), np.float32)
        b2 = np.zeros((self.S_pad, 1, NB), np.float32)
        w3 = np.zeros((self.S_pad, NB, self.C_pad), np.float32)
        b3_total = np.zeros((1, C), np.float32)
        self.params_f32 = []  # unpadded f32 copies for the numpy reference check
        for i, scale in enumerate(self.scales):
            key, k1, k2, k3, k4, k5, k6 = jax.random.split(key, 7)
            K = scale * D
            p = dict(
                w1=np.asarray(jax.random.normal(k1, (K, NB), jnp.float32)) / np.sqrt(K),
                b1=np.asarray(jax.random.normal(k2, (1, NB), jnp.float32)) * 0.01,
                w2=np.asarray(jax.random.normal(k3, (NB, NB), jnp.float32)) / np.sqrt(NB),
                b2=np.asarray(jax.random.normal(k4, (1, NB), jnp.float32)) * 0.01,
                w3=np.asarray(jax.random.normal(k5, (NB, C), jnp.float32)) / np.sqrt(NB),
                b3=np.asarray(jax.random.normal(k6, (1, C), jnp.float32)) * 0.01,
            )
            self.params_f32.append(p)
            w1[i, :K, :] = p["w1"]
            b1[i, 0, :] = p["b1"][0]
            w2[i] = p["w2"]
            b2[i, 0, :] = p["b2"][0]
            w3[i, :, :C] = p["w3"]
            # b3 is hoisted out of the in-kernel accumulation (relation counts are static).
            b3_total += self.counts[i] * p["b3"]

        self.stacked = dict(
            w1=jnp.asarray(w1, jnp.bfloat16), b1=jnp.asarray(b1, jnp.float32),
            w2=jnp.asarray(w2, jnp.bfloat16), b2=jnp.asarray(b2, jnp.float32),
            w3=jnp.asarray(w3, jnp.bfloat16),
        )
        self.b3_total = jnp.asarray(b3_total, jnp.float32)

        # Static per-(scale, relation-slot) validity mask: dummy slots must be zeroed before the
        # in-kernel reduce because relu(b1)/b2 leak nonzero logits even for all-zero inputs.
        rel_valid = np.zeros((self.S_pad, self.P, 1), np.float32)
        for sid in range(S):
            rel_valid[sid, :self.counts[sid], 0] = 1.0
        self._rel_valid = jnp.asarray(rel_valid)

        self._core = jax.jit(self._forward_core)

    # ---- host-side relation subsampling (numpy, mirrors the PyTorch forward) ---------------------
    def _sample_relations(self, rng):
        T = self.num_frames
        frame_idx = np.zeros((self.S_pad, self.P, T), np.int32)
        frames0 = self.relations_scales[0][0]
        frame_idx[0, 0, :len(frames0)] = frames0
        for sid in range(1, self.num_scales):
            chosen = rng.choice(len(self.relations_scales[sid]),
                                self.subsample_scales[sid], replace=False)
            for j, idx in enumerate(chosen):
                frames = self.relations_scales[sid][int(idx)]
                frame_idx[sid, j, :len(frames)] = frames
        return frame_idx

    # ---- jitted core: one gather + one fused pallas_call ------------------------------------------
    def _forward_core(self, x, frame_idx):
        B, T, D = x.shape
        K = T * D
        S_pad, P, half = self.S_pad, self.P, self.half
        NB, K_pad, C_pad = self.num_bottleneck, self.K_pad, self.C_pad
        B_pad = _round_up(max(B, 16), 16)        # bf16 sublane tile
        PB = P * B_pad
        p = self.stacked

        # Hoisted ReLU (elementwise, commutes with the gather).
        x_r = jnp.maximum(x, 0.0)
        # One gather builds every relation's flattened features. Junk frame slots beyond scale*D are
        # NOT masked here: the zero-padded rows of w1 already nullify them.
        g = x_r[:, frame_idx, :]                                        # (B, S_pad, P, T, D)
        g = jnp.transpose(g, (1, 2, 0, 3, 4)).reshape(S_pad, P, B, K)
        g = jnp.pad(g, ((0, 0), (0, 0), (0, B_pad - B), (0, K_pad - K)))
        slab = g.reshape(S_pad, PB, K_pad).astype(jnp.bfloat16)

        # Per-row relation-validity mask for the stacked M dimension (values are static).
        rel_mask = jnp.broadcast_to(self._rel_valid[:, :, None, :],
                                    (S_pad, P, B_pad, 1)).reshape(S_pad, PB, 1)

        def scale_head_kernel(x_ref, m_ref, w1_ref, b1_ref, w2_ref, b2_ref, w3_ref, o_ref):
            @pl.when(pl.program_id(1) == 0)
            def _():
                o_ref[...] = jnp.zeros_like(o_ref)

            xb = x_ref[...]                                                              # (PB, K_pad) bf16
            h1 = jnp.dot(xb, w1_ref[...], preferred_element_type=jnp.float32) + b1_ref[...]
            h1 = jnp.maximum(h1, 0.0).astype(jnp.bfloat16)
            h2 = jnp.dot(h1, w2_ref[...], preferred_element_type=jnp.float32) + b2_ref[...]
            h2 = jnp.maximum(h2, 0.0).astype(jnp.bfloat16)
            # TODO(synk): nn.Dropout(p=0.6) is treated as identity (inference / eval mode).
            logits = jnp.dot(h2, w3_ref[...], preferred_element_type=jnp.float32)        # (PB, C_pad)
            logits = logits * m_ref[...]          # kill dummy-relation sub-blocks (bias leakage)
            acc = logits[0:B_pad, :]
            for rp in range(1, P):                # reduce the P relation sub-blocks (static unroll)
                acc = acc + logits[rp * B_pad:(rp + 1) * B_pad, :]
            o_ref[...] += acc

        wmap = lambda c, s: (c * half + s, 0, 0)   # grid index -> scale id (no scalar prefetch needed)
        grid_spec = pltpu.PrefetchScalarGridSpec(
            num_scalar_prefetch=0,
            grid=(2, half),                        # (TensorCore half, scales within half)
            in_specs=[
                pl.BlockSpec((None, PB, K_pad), wmap),
                pl.BlockSpec((None, PB, 1),     wmap),
                pl.BlockSpec((None, K_pad, NB), wmap),
                pl.BlockSpec((None, 1, NB),     wmap),
                pl.BlockSpec((None, NB, NB),    wmap),
                pl.BlockSpec((None, 1, NB),     wmap),
                pl.BlockSpec((None, NB, C_pad), wmap),
            ],
            out_specs=pl.BlockSpec((None, B_pad, C_pad), lambda c, s: (c, 0, 0)),
        )
        partials = pl.pallas_call(
            scale_head_kernel,
            grid_spec=grid_spec,
            out_shape=jax.ShapeDtypeStruct((2, B_pad, C_pad), jnp.float32),
            compiler_params=pltpu.CompilerParams(
                dimension_semantics=("parallel", "arbitrary")),
        )(slab, rel_mask, p["w1"], p["b1"], p["w2"], p["b2"], p["w3"])

        out = partials[0] + partials[1]
        return out[:B, :self.num_class] + self.b3_total

    def forward(self, x, rng=None):
        """x: (B, num_frames, img_feature_dim) float32 -> (B, num_class) float32."""
        # Deterministic stand-in for np.random.choice in the original forward when rng is None.
        rng = np.random.RandomState(0) if rng is None else rng
        frame_idx = self._sample_relations(rng)
        return self._core(x, jnp.asarray(frame_idx))


def _reference_forward(module, x_np, frame_idx):
    """Pure numpy f32 reference matching the original PyTorch math (eval mode)."""
    x_np = np.maximum(np.asarray(x_np, np.float32), 0.0)
    B, T, D = x_np.shape
    acc = np.zeros((B, module.num_class), np.float32)
    for sid in range(module.num_scales):
        s = module.scales[sid]
        p = module.params_f32[sid]
        for j in range(module.counts[sid]):
            frames = frame_idx[sid, j, :s]
            feat = x_np[:, frames, :].reshape(B, s * D)
            h1 = np.maximum(feat @ p["w1"] + p["b1"], 0.0)
            h2 = np.maximum(h1 @ p["w2"] + p["b2"], 0.0)
            acc += h2 @ p["w3"] + p["b3"]
    return acc


if __name__ == "__main__":
    B, num_frames, img_feature_dim, num_class = 4, 8, 32, 16

    key = jax.random.PRNGKey(0)
    key_params, key_x = jax.random.split(key)

    module = RelationModuleMultiScaleWithClassifier(
        img_feature_dim=img_feature_dim,
        num_frames=num_frames,
        num_class=num_class,
        key=key_params,
    )

    x = jax.random.normal(key_x, (B, num_frames, img_feature_dim), dtype=jnp.float32)

    out = module.forward(x)
    out = jax.block_until_ready(out)
    assert out.shape == (B, num_class) and out.dtype == jnp.float32
    assert bool(jnp.all(jnp.isfinite(out)))

    # Loose correctness check vs an f32 numpy reference (kernel uses bf16 weights/activations).
    frame_idx = module._sample_relations(np.random.RandomState(0))
    ref = _reference_forward(module, np.asarray(x), frame_idx)
    np.testing.assert_allclose(np.asarray(out), ref, rtol=0.1, atol=0.25)

    print("KERNEL_OK")
</pallas_src>

<mosaic_0001>
module attributes {stable_mosaic.version = 11 : i64} {
  func.func @scale_head_kernel(%arg0: i32, %arg1: i32, %arg2: memref<1x48x256xbf16, #tpu.memory_space<vmem>>, %arg3: memref<1x48x1xf32, #tpu.memory_space<vmem>>, %arg4: memref<1x256x256xbf16, #tpu.memory_space<vmem>>, %arg5: memref<1x1x256xf32, #tpu.memory_space<vmem>>, %arg6: memref<1x256x256xbf16, #tpu.memory_space<vmem>>, %arg7: memref<1x1x256xf32, #tpu.memory_space<vmem>>, %arg8: memref<1x256x128xbf16, #tpu.memory_space<vmem>>, %arg9: memref<1x16x128xf32, #tpu.memory_space<vmem>>) attributes {dimension_semantics = [#tpu.dimension_semantics<parallel>, #tpu.dimension_semantics<arbitrary>], iteration_bounds = array<i64: 2, 4>, scalar_prefetch = 0 : i64, scratch_operands = 0 : i64, tpu.core_type = #tpu.core_type<tc>, window_params = [{transform_indices = @transform_0, window_bounds = array<i64: 1, 48, 256>}, {transform_indices = @transform_1, window_bounds = array<i64: 1, 48, 1>}, {transform_indices = @transform_2, window_bounds = array<i64: 1, 256, 256>}, {transform_indices = @transform_3, window_bounds = array<i64: 1, 1, 256>}, {transform_indices = @transform_4, window_bounds = array<i64: 1, 256, 256>}, {transform_indices = @transform_5, window_bounds = array<i64: 1, 1, 256>}, {transform_indices = @transform_6, window_bounds = array<i64: 1, 256, 128>}, {transform_indices = @transform_7, window_bounds = array<i64: 1, 16, 128>}]} {
    %c0_i32 = arith.constant 0 : i32
    %0 = arith.cmpi eq, %arg1, %c0_i32 : i32
    %1 = arith.extui %0 : i1 to i32
    %c0_i32_0 = arith.constant 0 : i32
    %2 = arith.cmpi ne, %1, %c0_i32_0 : i32
    scf.if %2 {
      %cst_31 = arith.constant 0.000000e+00 : f32
      %43 = vector.broadcast %cst_31 : f32 to vector<16x128xf32>
      %c0_32 = arith.constant 0 : index
      %c0_33 = arith.constant 0 : index
      %c0_34 = arith.constant 0 : index
      %44 = vector.load %arg9[%c0_32, %c0_33, %c0_34] : memref<1x16x128xf32, #tpu.memory_space<vmem>>, vector<1x16x128xf32>
      %45 = vector.shape_cast %44 : vector<1x16x128xf32> to vector<16x128xf32>
      %46 = vector.shape_cast %43 : vector<16x128xf32> to vector<1x16x128xf32>
      tpu.vector_store %arg9[%c0_32, %c0_33, %c0_34], %46 {strides = array<i32>} : memref<1x16x128xf32, #tpu.memory_space<vmem>>, vector<1x16x128xf32>,
    } else {
    }
    %c0 = arith.constant 0 : index
    %c0_1 = arith.constant 0 : index
    %c0_2 = arith.constant 0 : index
    %3 = vector.load %arg2[%c0, %c0_1, %c0_2] : memref<1x48x256xbf16, #tpu.memory_space<vmem>>, vector<1x48x256xbf16>
    %4 = vector.shape_cast %3 : vector<1x48x256xbf16> to vector<48x256xbf16>
    %c0_3 = arith.constant 0 : index
    %c0_4 = arith.constant 0 : index
    %c0_5 = arith.constant 0 : index
    %5 = vector.load %arg4[%c0_3, %c0_4, %c0_5] : memref<1x256x256xbf16, #tpu.memory_space<vmem>>, vector<1x256x256xbf16>
    %6 = vector.shape_cast %5 : vector<1x256x256xbf16> to vector<256x256xbf16>
    %cst = arith.constant dense<0.000000e+00> : vector<48x256xf32>
    %7 = tpu.matmul %4, %6, %cst {dimension_numbers = #tpu.dot_dimension_numbers<[1], [0], [0], [1], [0, 0, 1, 1], [], []>} : vector<48x256xbf16>, vector<256x256xbf16>, vector<48x256xf32> -> vector<48x256xf32>
    %c0_6 = arith.constant 0 : index
    %c0_7 = arith.constant 0 : index
    %c0_8 = arith.constant 0 : index
    %8 = vector.load %arg5[%c0_6, %c0_7, %c0_8] : memref<1x1x256xf32, #tpu.memory_space<vmem>>, vector<1x1x256xf32>
    %9 = vector.shape_cast %8 : vector<1x1x256xf32> to vector<1x256xf32>
    %10 = vector.broadcast %9 : vector<1x256xf32> to vector<48x256xf32>
    %11 = arith.addf %7, %10 : vector<48x256xf32>
    %cst_9 = arith.constant 0.000000e+00 : f32
    %12 = vector.broadcast %cst_9 : f32 to vector<48x256xf32>
    %13 = arith.maximumf %11, %12 : vector<48x256xf32>
    %14 = arith.truncf %13 : vector<48x256xf32> to vector<48x256xbf16>
    %c0_10 = arith.constant 0 : index
    %c0_11 = arith.constant 0 : index
    %c0_12 = arith.constant 0 : index
    %15 = vector.load %arg6[%c0_10, %c0_11, %c0_12] : memref<1x256x256xbf16, #tpu.memory_space<vmem>>, vector<1x256x256xbf16>
    %16 = vector.shape_cast %15 : vector<1x256x256xbf16> to vector<256x256xbf16>
    %cst_13 = arith.constant dense<0.000000e+00> : vector<48x256xf32>
    %17 = tpu.matmul %14, %16, %cst_13 {dimension_numbers = #tpu.dot_dimension_numbers<[1], [0], [0], [1], [0, 0, 1, 1], [], []>} : vector<48x256xbf16>, vector<256x256xbf16>, vector<48x256xf32> -> vector<48x256xf32>
    %c0_14 = arith.constant 0 : index
    %c0_15 = arith.constant 0 : index
    %c0_16 = arith.constant 0 : index
    %18 = vector.load %arg7[%c0_14, %c0_15, %c0_16] : memref<1x1x256xf32, #tpu.memory_space<vmem>>, vector<1x1x256xf32>
    %19 = vector.shape_cast %18 : vector<1x1x256xf32> to vector<1x256xf32>
    %20 = vector.broadcast %19 : vector<1x256xf32> to vector<48x256xf32>
    %21 = arith.addf %17, %20 : vector<48x256xf32>
    %cst_17 = arith.constant 0.000000e+00 : f32
    %22 = vector.broadcast %cst_17 : f32 to vector<48x256xf32>
    %23 = arith.maximumf %21, %22 : vector<48x256xf32>
    %24 = arith.truncf %23 : vector<48x256xf32> to vector<48x256xbf16>
    %c0_18 = arith.constant 0 : index
    %c0_19 = arith.constant 0 : index
    %c0_20 = arith.constant 0 : index
    %25 = vector.load %arg8[%c0_18, %c0_19, %c0_20] : memref<1x256x128xbf16, #tpu.memory_space<vmem>>, vector<1x256x128xbf16>
    %26 = vector.shape_cast %25 : vector<1x256x128xbf16> to vector<256x128xbf16>
    %cst_21 = arith.constant dense<0.000000e+00> : vector<48x128xf32>
    %27 = tpu.matmul %24, %26, %cst_21 {dimension_numbers = #tpu.dot_dimension_numbers<[1], [0], [0], [1], [0, 0, 1, 1], [], []>} : vector<48x256xbf16>, vector<256x128xbf16>, vector<48x128xf32> -> vector<48x128xf32>
    %c0_22 = arith.constant 0 : index
    %c0_23 = arith.constant 0 : index
    %c0_24 = arith.constant 0 : index
    %28 = vector.load %arg3[%c0_22, %c0_23, %c0_24] : memref<1x48x1xf32, #tpu.memory_space<vmem>>, vector<1x48x1xf32>
    %29 = vector.shape_cast %28 : vector<1x48x1xf32> to vector<48x1xf32>
    %30 = vector.broadcast %29 : vector<48x1xf32> to vector<48x128xf32>
    %31 = arith.mulf %27, %30 : vector<48x128xf32>
    %32 = vector.extract_strided_slice %31 {offsets = [0, 0], sizes = [16, 128], strides = [1, 1]} : vector<48x128xf32> to vector<16x128xf32>
    %33 = vector.extract_strided_slice %31 {offsets = [16, 0], sizes = [16, 128], strides = [1, 1]} : vector<48x128xf32> to vector<16x128xf32>
    %34 = arith.addf %32, %33 : vector<16x128xf32>
    %35 = vector.extract_strided_slice %31 {offsets = [32, 0], sizes = [16, 128], strides = [1, 1]} : vector<48x128xf32> to vector<16x128xf32>
    %36 = arith.addf %34, %35 : vector<16x128xf32>
    %c0_25 = arith.constant 0 : index
    %c0_26 = arith.constant 0 : index
    %c0_27 = arith.constant 0 : index
    %37 = vector.load %arg9[%c0_25, %c0_26, %c0_27] : memref<1x16x128xf32, #tpu.memory_space<vmem>>, vector<1x16x128xf32>
    %38 = vector.shape_cast %37 : vector<1x16x128xf32> to vector<16x128xf32>
    %39 = arith.addf %38, %36 : vector<16x128xf32>
    %c0_28 = arith.constant 0 : index
    %c0_29 = arith.constant 0 : index
    %c0_30 = arith.constant 0 : index
    %40 = vector.load %arg9[%c0_28, %c0_29, %c0_30] : memref<1x16x128xf32, #tpu.memory_space<vmem>>, vector<1x16x128xf32>
    %41 = vector.shape_cast %40 : vector<1x16x128xf32> to vector<16x128xf32>
    %42 = vector.shape_cast %39 : vector<16x128xf32> to vector<1x16x128xf32>
    tpu.vector_store %arg9[%c0_28, %c0_29, %c0_30], %42 {strides = array<i32>} : memref<1x16x128xf32, #tpu.memory_space<vmem>>, vector<1x16x128xf32>,
    return
  }
  func.func @transform_0(%arg0: i32, %arg1: i32) -> (i32, i32, i32) {
    %c4_i32 = arith.constant 4 : i32
    %0 = arith.muli %arg0, %c4_i32 : i32
    %1 = arith.addi %0, %arg1 : i32
    %c0_i32 = arith.constant 0 : i32
    %c0_i32_0 = arith.constant 0 : i32
    %c0_i32_1 = arith.constant 0 : i32
    return %1, %c0_i32, %c0_i32_0 : i32, i32, i32
  }
  func.func @transform_1(%arg0: i32, %arg1: i32) -> (i32, i32, i32) {
    %c4_i32 = arith.constant 4 : i32
    %0 = arith.muli %arg0, %c4_i32 : i32
    %1 = arith.addi %0, %arg1 : i32
    %c0_i32 = arith.constant 0 : i32
    %c0_i32_0 = arith.constant 0 : i32
    %c0_i32_1 = arith.constant 0 : i32
    return %1, %c0_i32, %c0_i32_0 : i32, i32, i32
  }
  func.func @transform_2(%arg0: i32, %arg1: i32) -> (i32, i32, i32) {
    %c4_i32 = arith.constant 4 : i32
    %0 = arith.muli %arg0, %c4_i32 : i32
    %1 = arith.addi %0, %arg1 : i32
    %c0_i32 = arith.constant 0 : i32
    %c0_i32_0 = arith.constant 0 : i32
    %c0_i32_1 = arith.constant 0 : i32
    return %1, %c0_i32, %c0_i32_0 : i32, i32, i32
  }
  func.func @transform_3(%arg0: i32, %arg1: i32) -> (i32, i32, i32) {
    %c4_i32 = arith.constant 4 : i32
    %0 = arith.muli %arg0, %c4_i32 : i32
    %1 = arith.addi %0, %arg1 : i32
    %c0_i32 = arith.constant 0 : i32
    %c0_i32_0 = arith.constant 0 : i32
    %c0_i32_1 = arith.constant 0 : i32
    return %1, %c0_i32, %c0_i32_0 : i32, i32, i32
  }
  func.func @transform_4(%arg0: i32, %arg1: i32) -> (i32, i32, i32) {
    %c4_i32 = arith.constant 4 : i32
    %0 = arith.muli %arg0, %c4_i32 : i32
    %1 = arith.addi %0, %arg1 : i32
    %c0_i32 = arith.constant 0 : i32
    %c0_i32_0 = arith.constant 0 : i32
    %c0_i32_1 = arith.constant 0 : i32
    return %1, %c0_i32, %c0_i32_0 : i32, i32, i32
  }
  func.func @transform_5(%arg0: i32, %arg1: i32) -> (i32, i32, i32) {
    %c4_i32 = arith.constant 4 : i32
    %0 = arith.muli %arg0, %c4_i32 : i32
    %1 = arith.addi %0, %arg1 : i32
    %c0_i32 = arith.constant 0 : i32
    %c0_i32_0 = arith.constant 0 : i32
    %c0_i32_1 = arith.constant 0 : i32
    return %1, %c0_i32, %c0_i32_0 : i32, i32, i32
  }
  func.func @transform_6(%arg0: i32, %arg1: i32) -> (i32, i32, i32) {
    %c4_i32 = arith.constant 4 : i32
    %0 = arith.muli %arg0, %c4_i32 : i32
    %1 = arith.addi %0, %arg1 : i32
    %c0_i32 = arith.constant 0 : i32
    %c0_i32_0 = arith.constant 0 : i32
    %c0_i32_1 = arith.constant 0 : i32
    return %1, %c0_i32, %c0_i32_0 : i32, i32, i32
  }
  func.func @transform_7(%arg0: i32, %arg1: i32) -> (i32, i32, i32) {
    %c0_i32 = arith.constant 0 : i32
    %c0_i32_0 = arith.constant 0 : i32
    %c0_i32_1 = arith.constant 0 : i32
    return %arg0, %c0_i32, %c0_i32_0 : i32, i32, i32
  }
}

</mosaic_0001>

<llo_original>
// kernel: _forward_core.1
$region0: #{_forward_core.1}
  #allocation0 [shape = 'u32[]', space=smem, size = 0x4, offset = 0x4, fixed_abs, tag = 'smem constant byte address 0x4 - core index']
  #allocation1 [shape = 'u32[144,128]{1,0:T(1,128)}', space=vmem, size = 0x12000, scoped, tag = 'internal scratch']
  %s0 = inlined_call_operand.vmem [shape: bf16[8,48,256], index: 0, kind: input, shape index: {}]
  %s1 = inlined_call_operand.vmem [shape: f32[8,48,1], index: 1, kind: input, shape index: {}]
  %s2 = inlined_call_operand.vmem [shape: bf16[8,256,256], index: 2, kind: input, shape index: {}]
  %s3 = inlined_call_operand.vmem [shape: f32[8,1,256], index: 3, kind: input, shape index: {}]
  %s4 = inlined_call_operand.vmem [shape: bf16[8,256,256], index: 4, kind: input, shape index: {}]
  %s5 = inlined_call_operand.vmem [shape: f32[8,1,256], index: 5, kind: input, shape index: {}]
  %s6 = inlined_call_operand.vmem [shape: bf16[8,256,128], index: 6, kind: input, shape index: {}]
  %s7 = inlined_call_operand.vmem [shape: f32[2,16,128], index: 7, kind: output, shape index: {}]
  %s8 = sld [smem:[#allocation0]]
  $region65: #{_forward_core.1} parent=0
    _
  %s10 = ssub.s32 1, %s8
  %s11 = scalar_select 0, %s10, %s8
  loop: start=0, step=1, limit=10
  $region2: #{_forward_core.1} parent=0 // loop_pre_header
    _
  $region3: #{_forward_core.1} parent=0 // loop_header
    %s13 = sphi 0, %s17
    %p14 = scmp.ge.s32.totalorder %s13, 10
    %s20 = sphi 0, %s32
    %s21 = sphi 0, %s28
    %s22 = sphi 0, %s20
    %s23 = sphi 0, %s21
    %s24 = sphi 0, %s22
    %s25 = sphi 0, %s23
    %s39 = sphi 0, %s41
    %s42 = sphi 0, %s39
    %s43 = sphi 0, %s42
    %s59 = sphi 0, %s43
    %s69 = sphi 0, %s71
    %s72 = sphi 0, %s69
    %s73 = sphi 0, %s72
    %s89 = sphi 0, %s73
    %s99 = sphi 0, %s101
    %s102 = sphi 0, %s99
    %s103 = sphi 0, %s102
    %s119 = sphi 0, %s103
    %s129 = sphi 0, %s131
    %s132 = sphi 0, %s129
    %s133 = sphi 0, %s132
    %s149 = sphi 0, %s133
    %s159 = sphi 0, %s161
    %s162 = sphi 0, %s159
    %s163 = sphi 0, %s162
    %s179 = sphi 0, %s163
    %s189 = sphi 0, %s191
    %s192 = sphi 0, %s189
    %s193 = sphi 0, %s192
    %s209 = sphi 0, %s193
    %s219 = sphi 0, %s221
    %s222 = sphi 0, %s219
    %s223 = sphi 0, %s222
    %s239 = sphi 0, %s223
    %s245 = sphi 0, %s247
    %s248 = sphi 0, %s245
    %s249 = sphi 0, %s248
    %s265 = sphi 0, %s249
  $region4: #{_forward_core.1} parent=0 // loop_header_branch
    %16 = sbr.rel (%p14) target = $region8
  $region5: #{_forward_core.1} parent=0 // loop_body
    %s18 = ssub.s32 %s13, 1
    %s19 = ssub.s32 %s13, 2
    %s26 = sadd.s32 1, %s21
    %p27 = scmp.ge.s32.totalorder %s26, 4
    %s28 = scalar_select %p27, 0, %s26
    %s29 = sadd.s32 1, %s20
    %s30 = scalar_select %p27, %s29, %s20
    %p31 = scmp.ge.s32.totalorder %s30, 2
    %s32 = scalar_select %p31, 0, %s30
    %s33 = smul.u32 %s20, 4
    %s34 = sadd.s32 %s33, %s21
    %s35 = smul.u32 %s32, 4
    %s36 = sadd.s32 %s35, %s28
    %s37 = ssub.s32 %s34, %s36
    %p38 = scmp.eq.s32.totalorder %s37, 0
    %s40 = sadd.s32 %s39, 1
    %s41 = scalar_select %p38, %s39, %s40
    %p44 = pneg %p38
    %p45 = scmp.eq.s32.totalorder %s13, 7
    %p46 = por %p44, %p45
    %p47 = scmp.ne.s32.totalorder %s39, %s42
    %p48 = scmp.eq.s32.totalorder %s13, 0
    %p49 = por %p47, %p48
    %p50 = scmp.ne.s32.totalorder %s39, %s42
    %p51 = scmp.eq.s32.totalorder %s18, 7
    %p52 = por %p50, %p51
    %p53 = scmp.ne.s32.totalorder %s42, %s43
    %p54 = scmp.eq.s32.totalorder %s18, 0
    %p55 = por %p53, %p54
    %p56 = scmp.ne.s32.totalorder %s42, %s43
    %p57 = scmp.eq.s32.totalorder %s19, 7
    %p58 = por %p56, %p57
    %p60 = scmp.ne.s32.totalorder %s43, %s59
    %p61 = scmp.eq.s32.totalorder %s19, 0
    %p62 = por %p60, %p61
    %s63 = smul.u32 %s20, 4
    %s64 = sadd.s32 %s63, %s21
    %s65 = smul.u32 %s32, 4
    %s66 = sadd.s32 %s65, %s28
    %s67 = ssub.s32 %s64, %s66
    %p68 = scmp.eq.s32.totalorder %s67, 0
    %s70 = sadd.s32 %s69, 1
    %s71 = scalar_select %p68, %s69, %s70
    %p74 = pneg %p68
    %p75 = scmp.eq.s32.totalorder %s13, 7
    %p76 = por %p74, %p75
    %p77 = scmp.ne.s32.totalorder %s69, %s72
    %p78 = scmp.eq.s32.totalorder %s13, 0
    %p79 = por %p77, %p78
    %p80 = scmp.ne.s32.totalorder %s69, %s72
    %p81 = scmp.eq.s32.totalorder %s18, 7
    %p82 = por %p80, %p81
    %p83 = scmp.ne.s32.totalorder %s72, %s73
    %p84 = scmp.eq.s32.totalorder %s18, 0
    %p85 = por %p83, %p84
    %p86 = scmp.ne.s32.totalorder %s72, %s73
    %p87 = scmp.eq.s32.totalorder %s19, 7
    %p88 = por %p86, %p87
    %p90 = scmp.ne.s32.totalorder %s73, %s89
    %p91 = scmp.eq.s32.totalorder %s19, 0
    %p92 = por %p90, %p91
    %s93 = smul.u32 %s20, 4
    %s94 = sadd.s32 %s93, %s21
    %s95 = smul.u32 %s32, 4
    %s96 = sadd.s32 %s95, %s28
    %s97 = ssub.s32 %s94, %s96
    %p98 = scmp.eq.s32.totalorder %s97, 0
    %s100 = sadd.s32 %s99, 1
    %s101 = scalar_select %p98, %s99, %s100
    %p104 = pneg %p98
    %p105 = scmp.eq.s32.totalorder %s13, 7
    %p106 = por %p104, %p105
    %p107 = scmp.ne.s32.totalorder %s99, %s102
    %p108 = scmp.eq.s32.totalorder %s13, 0
    %p109 = por %p107, %p108
    %p110 = scmp.ne.s32.totalorder %s99, %s102
    %p111 = scmp.eq.s32.totalorder %s18, 7
    %p112 = por %p110, %p111
    %p113 = scmp.ne.s32.totalorder %s102, %s103
    %p114 = scmp.eq.s32.totalorder %s18, 0
    %p115 = por %p113, %p114
    %p116 = scmp.ne.s32.totalorder %s102, %s103
    %p117 = scmp.eq.s32.totalorder %s19, 7
    %p118 = por %p116, %p117
    %p120 = scmp.ne.s32.totalorder %s103, %s119
    %p121 = scmp.eq.s32.totalorder %s19, 0
    %p122 = por %p120, %p121
    %s123 = smul.u32 %s20, 4
    %s124 = sadd.s32 %s123, %s21
    %s125 = smul.u32 %s32, 4
    %s126 = sadd.s32 %s125, %s28
    %s127 = ssub.s32 %s124, %s126
    %p128 = scmp.eq.s32.totalorder %s127, 0
    %s130 = sadd.s32 %s129, 1
    %s131 = scalar_select %p128, %s129, %s130
    %p134 = pneg %p128
    %p135 = scmp.eq.s32.totalorder %s13, 7
    %p136 = por %p134, %p135
    %p137 = scmp.ne.s32.totalorder %s129, %s132
    %p138 = scmp.eq.s32.totalorder %s13, 0
    %p139 = por %p137, %p138
    %p140 = scmp.ne.s32.totalorder %s129, %s132
    %p141 = scmp.eq.s32.totalorder %s18, 7
    %p142 = por %p140, %p141
    %p143 = scmp.ne.s32.totalorder %s132, %s133
    %p144 = scmp.eq.s32.totalorder %s18, 0
    %p145 = por %p143, %p144
    %p146 = scmp.ne.s32.totalorder %s132, %s133
    %p147 = scmp.eq.s32.totalorder %s19, 7
    %p148 = por %p146, %p147
    %p150 = scmp.ne.s32.totalorder %s133, %s149
    %p151 = scmp.eq.s32.totalorder %s19, 0
    %p152 = por %p150, %p151
    %s153 = smul.u32 %s20, 4
    %s154 = sadd.s32 %s153, %s21
    %s155 = smul.u32 %s32, 4
    %s156 = sadd.s32 %s155, %s28
    %s157 = ssub.s32 %s154, %s156
    %p158 = scmp.eq.s32.totalorder %s157, 0
    %s160 = sadd.s32 %s159, 1
    %s161 = scalar_select %p158, %s159, %s160
    %p164 = pneg %p158
    %p165 = scmp.eq.s32.totalorder %s13, 7
    %p166 = por %p164, %p165
    %p167 = scmp.ne.s32.totalorder %s159, %s162
    %p168 = scmp.eq.s32.totalorder %s13, 0
    %p169 = por %p167, %p168
    %p170 = scmp.ne.s32.totalorder %s159, %s162
    %p171 = scmp.eq.s32.totalorder %s18, 7
    %p172 = por %p170, %p171
    %p173 = scmp.ne.s32.totalorder %s162, %s163
    %p174 = scmp.eq.s32.totalorder %s18, 0
    %p175 = por %p173, %p174
    %p176 = scmp.ne.s32.totalorder %s162, %s163
    %p177 = scmp.eq.s32.totalorder %s19, 7
    %p178 = por %p176, %p177
    %p180 = scmp.ne.s32.totalorder %s163, %s179
    %p181 = scmp.eq.s32.totalorder %s19, 0
    %p182 = por %p180, %p181
    %s183 = smul.u32 %s20, 4
    %s184 = sadd.s32 %s183, %s21
    %s185 = smul.u32 %s32, 4
    %s186 = sadd.s32 %s185, %s28
    %s187 = ssub.s32 %s184, %s186
    %p188 = scmp.eq.s32.totalorder %s187, 0
    %s190 = sadd.s32 %s189, 1
    %s191 = scalar_select %p188, %s189, %s190
    %p194 = pneg %p188
    %p195 = scmp.eq.s32.totalorder %s13, 7
    %p196 = por %p194, %p195
    %p197 = scmp.ne.s32.totalorder %s189, %s192
    %p198 = scmp.eq.s32.totalorder %s13, 0
    %p199 = por %p197, %p198
    %p200 = scmp.ne.s32.totalorder %s189, %s192
    %p201 = scmp.eq.s32.totalorder %s18, 7
    %p202 = por %p200, %p201
    %p203 = scmp.ne.s32.totalorder %s192, %s193
    %p204 = scmp.eq.s32.totalorder %s18, 0
    %p205 = por %p203, %p204
    %p206 = scmp.ne.s32.totalorder %s192, %s193
    %p207 = scmp.eq.s32.totalorder %s19, 7
    %p208 = por %p206, %p207
    %p210 = scmp.ne.s32.totalorder %s193, %s209
    %p211 = scmp.eq.s32.totalorder %s19, 0
    %p212 = por %p210, %p211
    %s213 = smul.u32 %s20, 4
    %s214 = sadd.s32 %s213, %s21
    %s215 = smul.u32 %s32, 4
    %s216 = sadd.s32 %s215, %s28
    %s217 = ssub.s32 %s214, %s216
    %p218 = scmp.eq.s32.totalorder %s217, 0
    %s220 = sadd.s32 %s219, 1
    %s221 = scalar_select %p218, %s219, %s220
    %p224 = pneg %p218
    %p225 = scmp.eq.s32.totalorder %s13, 7
    %p226 = por %p224, %p225
    %p227 = scmp.ne.s32.totalorder %s219, %s222
    %p228 = scmp.eq.s32.totalorder %s13, 0
    %p229 = por %p227, %p228
    %p230 = scmp.ne.s32.totalorder %s219, %s222
    %p231 = scmp.eq.s32.totalorder %s18, 7
    %p232 = por %p230, %p231
    %p233 = scmp.ne.s32.totalorder %s222, %s223
    %p234 = scmp.eq.s32.totalorder %s18, 0
    %p235 = por %p233, %p234
    %p236 = scmp.ne.s32.totalorder %s222, %s223
    %p237 = scmp.eq.s32.totalorder %s19, 7
    %p238 = por %p236, %p237
    %p240 = scmp.ne.s32.totalorder %s223, %s239
    %p241 = scmp.eq.s32.totalorder %s19, 0
    %p242 = por %p240, %p241
    %s243 = ssub.s32 %s20, %s32
    %p244 = scmp.eq.s32.totalorder %s243, 0
    %s246 = sadd.s32 %s245, 1
    %s247 = scalar_select %p244, %s245, %s246
    %p250 = pneg %p244
    %p251 = scmp.eq.s32.totalorder %s13, 7
    %p252 = por %p250, %p251
    %p253 = scmp.ne.s32.totalorder %s245, %s248
    %p254 = scmp.eq.s32.totalorder %s13, 0
    %p255 = por %p253, %p254
    %p256 = scmp.ne.s32.totalorder %s245, %s248
    %p257 = scmp.eq.s32.totalorder %s18, 7
    %p258 = por %p256, %p257
    %p259 = scmp.ne.s32.totalorder %s248, %s249
    %p260 = scmp.eq.s32.totalorder %s18, 0
    %p261 = por %p259, %p260
    %p262 = scmp.ne.s32.totalorder %s248, %s249
    %p263 = scmp.eq.s32.totalorder %s19, 7
    %p264 = por %p262, %p263
    %p266 = scmp.ne.s32.totalorder %s249, %s265
    %p267 = scmp.eq.s32.totalorder %s19, 0
    %p268 = por %p266, %p267
    %p269 = scmp.le.s32.totalorder 1, %s13
    %p270 = scmp.lt.s32.totalorder %s13, 9
    %p271 = pnand %p269, %p270
    %p272 = pneg %p271
    // Predicated region
    $region9: #{_forward_core.1} parent=5 // pred_check
      _
    $region10: #{_forward_core.1} parent=5 // pred_check_branch
      %274 = sbr.rel (%p271) target = $region12
    $region11: #{_forward_core.1} parent=5 // pred_region
      %s275 = ssub.s32 %s13, 1
    $region12: #{_forward_core.1} parent=5 // pred_fallthru
      _
    %p276 = scmp.lt.s32.totalorder %s13, 8
    // Predicated region
    $region13: #{_forward_core.1} parent=5 // pred_check
      %p277 = pneg %p276
    $region14: #{_forward_core.1} parent=5 // pred_check_branch
      %279 = sbr.rel (%p277) target = $region16
    $region15: #{_forward_core.1} parent=5 // pred_region
      // Predicated region
      $region17: #{_forward_core.1} parent=15 // pred_check
        %p280 = pneg %p49
      $region18: #{_forward_core.1} parent=15 // pred_check_branch
        %282 = sbr.rel (%p280) target = $region20
      $region19: #{_forward_core.1} parent=15 // pred_region
        %s283 = smul.u32 %s20, 4
        %s284 = sadd.s32 %s283, %s21
        %p285 = scmp.lt.s32.totalorder %s284, 7
        %s286 = scalar_select %p285, %s284, 7
        %s287 = smul.addr %s286, 12
        %s288 = smul.addr %s287, 4
        %s289 = scalar_lea.vmem %s0, %s288
        %s290 = smul.u32 %s20, 4
        %s291 = sadd.s32 %s290, %s21
      $region20: #{_forward_core.1} parent=15 // pred_fallthru
        _
      // Predicated region
      $region21: #{_forward_core.1} parent=15 // pred_check
        %p292 = pneg %p79
      $region22: #{_forward_core.1} parent=15 // pred_check_branch
        %294 = sbr.rel (%p292) target = $region24
      $region23: #{_forward_core.1} parent=15 // pred_region
        %s295 = smul.u32 %s20, 4
        %s296 = sadd.s32 %s295, %s21
        %p297 = scmp.lt.s32.totalorder %s296, 7
        %s298 = scalar_select %p297, %s296, 7
        %s299 = smul.addr %s298, 6
        %s300 = smul.addr %s299, 8
        %s301 = scalar_lea.vmem %s1, %s300
        %s302 = smul.u32 %s20, 4
        %s303 = sadd.s32 %s302, %s21
      $region24: #{_forward_core.1} parent=15 // pred_fallthru
        _
      // Predicated region
      $region25: #{_forward_core.1} parent=15 // pred_check
        %p304 = pneg %p109
      $region26: #{_forward_core.1} parent=15 // pred_check_branch
        %306 = sbr.rel (%p304) target = $region28
      $region27: #{_forward_core.1} parent=15 // pred_region
        %s307 = smul.u32 %s20, 4
        %s308 = sadd.s32 %s307, %s21
        %p309 = scmp.lt.s32.totalorder %s308, 7
        %s310 = scalar_select %p309, %s308, 7
        %s311 = smul.addr %s310, 64
        %s312 = smul.addr %s311, 4
        %s313 = scalar_lea.vmem %s2, %s312
        %s314 = smul.u32 %s20, 4
        %s315 = sadd.s32 %s314, %s21
      $region28: #{_forward_core.1} parent=15 // pred_fallthru
        _
      // Predicated region
      $region29: #{_forward_core.1} parent=15 // pred_check
        %p316 = pneg %p139
      $region30: #{_forward_core.1} parent=15 // pred_check_branch
        %318 = sbr.rel (%p316) target = $region32
      $region31: #{_forward_core.1} parent=15 // pred_region
        %s319 = smul.u32 %s20, 4
        %s320 = sadd.s32 %s319, %s21
        %p321 = scmp.lt.s32.totalorder %s320, 7
        %s322 = scalar_select %p321, %s320, 7
        %s323 = smul.addr %s322, 2
        %s324 = scalar_lea.vmem %s3, %s323
        %s325 = smul.u32 %s20, 4
        %s326 = sadd.s32 %s325, %s21
      $region32: #{_forward_core.1} parent=15 // pred_fallthru
        _
      // Predicated region
      $region33: #{_forward_core.1} parent=15 // pred_check
        %p327 = pneg %p169
      $region34: #{_forward_core.1} parent=15 // pred_check_branch
        %329 = sbr.rel (%p327) target = $region36
      $region35: #{_forward_core.1} parent=15 // pred_region
        %s330 = smul.u32 %s20, 4
        %s331 = sadd.s32 %s330, %s21
        %p332 = scmp.lt.s32.totalorder %s331, 7
        %s333 = scalar_select %p332, %s331, 7
        %s334 = smul.addr %s333, 64
        %s335 = smul.addr %s334, 4
        %s336 = scalar_lea.vmem %s4, %s335
        %s337 = smul.u32 %s20, 4
        %s338 = sadd.s32 %s337, %s21
      $region36: #{_forward_core.1} parent=15 // pred_fallthru
        _
      // Predicated region
      $region37: #{_forward_core.1} parent=15 // pred_check
        %p339 = pneg %p199
      $region38: #{_forward_core.1} parent=15 // pred_check_branch
        %341 = sbr.rel (%p339) target = $region40
      $region39: #{_forward_core.1} parent=15 // pred_region
        %s342 = smul.u32 %s20, 4
        %s343 = sadd.s32 %s342, %s21
        %p344 = scmp.lt.s32.totalorder %s343, 7
        %s345 = scalar_select %p344, %s343, 7
        %s346 = smul.addr %s345, 2
        %s347 = scalar_lea.vmem %s5, %s346
        %s348 = smul.u32 %s20, 4
        %s349 = sadd.s32 %s348, %s21
      $region40: #{_forward_core.1} parent=15 // pred_fallthru
        _
      // Predicated region
      $region41: #{_forward_core.1} parent=15 // pred_check
        %p350 = pneg %p229
      $region42: #{_forward_core.1} parent=15 // pred_check_branch
        %352 = sbr.rel (%p350) target = $region44
      $region43: #{_forward_core.1} parent=15 // pred_region
        %s353 = smul.u32 %s20, 4
        %s354 = sadd.s32 %s353, %s21
        %p355 = scmp.lt.s32.totalorder %s354, 7
        %s356 = scalar_select %p355, %s354, 7
        %s357 = smul.addr %s356, 32
        %s358 = smul.addr %s357, 4
        %s359 = scalar_lea.vmem %s6, %s358
        %s360 = smul.u32 %s20, 4
        %s361 = sadd.s32 %s360, %s21
      $region44: #{_forward_core.1} parent=15 // pred_fallthru
        _
    $region16: #{_forward_core.1} parent=5 // pred_fallthru
      _
    %p362 = scmp.le.s32.totalorder 1, %s13
    %p363 = scmp.lt.s32.totalorder %s13, 9
    %p364 = pnand %p362, %p363
    %p365 = pneg %p364
    // Predicated region
    $region45: #{_forward_core.1} parent=5 // pred_check
      _
    $region46: #{_forward_core.1} parent=5 // pred_check_branch
      %367 = sbr.rel (%p364) target = $region48
    $region47: #{_forward_core.1} parent=5 // pred_region
      %s368 = ssub.s32 %s13, 1
      %s369 = smul.u32 %s22, 4
      %s370 = sadd.s32 %s369, %s23
      %p371 = scmp.lt.s32.totalorder %s370, 7
      %s372 = scalar_select %p371, %s370, 7
      %s373 = smul.addr %s372, 12
      %s374 = smul.addr %s373, 4
      %s375 = scalar_lea.vmem %s0, %s374
      %p376 = pneg %p55
      %p377 = pneg %p52
      %s378 = smul.u32 %s22, 4
      %s379 = sadd.s32 %s378, %s23
      %p380 = scmp.lt.s32.totalorder %s379, 7
      %s381 = scalar_select %p380, %s379, 7
      %s382 = smul.addr %s381, 6
      %s383 = smul.addr %s382, 8
      %s384 = scalar_lea.vmem %s1, %s383
      %p385 = pneg %p85
      %p386 = pneg %p82
      %s387 = smul.u32 %s22, 4
      %s388 = sadd.s32 %s387, %s23
      %p389 = scmp.lt.s32.totalorder %s388, 7
      %s390 = scalar_select %p389, %s388, 7
      %s391 = smul.addr %s390, 64
      %s392 = smul.addr %s391, 4
      %s393 = scalar_lea.vmem %s2, %s392
      %p394 = pneg %p115
      %p395 = pneg %p112
      %s396 = smul.u32 %s22, 4
      %s397 = sadd.s32 %s396, %s23
      %p398 = scmp.lt.s32.totalorder %s397, 7
      %s399 = scalar_select %p398, %s397, 7
      %s400 = smul.addr %s399, 2
      %s401 = scalar_lea.vmem %s3, %s400
      %p402 = pneg %p145
      %p403 = pneg %p142
      %s404 = smul.u32 %s22, 4
      %s405 = sadd.s32 %s404, %s23
      %p406 = scmp.lt.s32.totalorder %s405, 7
      %s407 = scalar_select %p406, %s405, 7
      %s408 = smul.addr %s407, 64
      %s409 = smul.addr %s408, 4
      %s410 = scalar_lea.vmem %s4, %s409
      %p411 = pneg %p175
      %p412 = pneg %p172
      %s413 = smul.u32 %s22, 4
      %s414 = sadd.s32 %s413, %s23
      %p415 = scmp.lt.s32.totalorder %s414, 7
      %s416 = scalar_select %p415, %s414, 7
      %s417 = smul.addr %s416, 2
      %s418 = scalar_lea.vmem %s5, %s417
      %p419 = pneg %p205
      %p420 = pneg %p202
      %s421 = smul.u32 %s22, 4
      %s422 = sadd.s32 %s421, %s23
      %p423 = scmp.lt.s32.totalorder %s422, 7
      %s424 = scalar_select %p423, %s422, 7
      %s425 = smul.addr %s424, 32
      %s426 = smul.addr %s425, 4
      %s427 = scalar_lea.vmem %s6, %s426
      %p428 = pneg %p235
      %p429 = pneg %p232
      %p430 = pneg %p261
      %p431 = pneg %p258
      %p432 = scmp.lt.s32.totalorder %s22, 1
      %s433 = scalar_select %p432, %s22, 1
      %s434 = smul.addr %s433, 2
      %s435 = smul.addr %s434, 8
      %s436 = scalar_lea.vmem %s7, %s435
      %s437 = smul.u32 %s22, 4
      %s438 = sadd.s32 %s437, %s23
      %p439 = scmp.lt.s32.totalorder %s438, 7
      %s440 = scalar_select %p439, %s438, 7
      %s441 = smul.addr %s440, 12
      %s442 = smul.addr %s441, 4
      %s443 = scalar_lea.vmem %s0, %s442
      %s444 = smul.u32 %s22, 4
      %s445 = sadd.s32 %s444, %s23
      %s446 = smul.u32 %s22, 4
      %s447 = sadd.s32 %s446, %s23
      %p448 = scmp.lt.s32.totalorder %s447, 7
      %s449 = scalar_select %p448, %s447, 7
      %s450 = smul.addr %s449, 6
      %s451 = smul.addr %s450, 8
      %s452 = scalar_lea.vmem %s1, %s451
      %s453 = smul.u32 %s22, 4
      %s454 = sadd.s32 %s453, %s23
      %s455 = smul.u32 %s22, 4
      %s456 = sadd.s32 %s455, %s23
      %p457 = scmp.lt.s32.totalorder %s456, 7
      %s458 = scalar_select %p457, %s456, 7
      %s459 = smul.addr %s458, 64
      %s460 = smul.addr %s459, 4
      %s461 = scalar_lea.vmem %s2, %s460
      %s462 = smul.u32 %s22, 4
      %s463 = sadd.s32 %s462, %s23
      %s464 = smul.u32 %s22, 4
      %s465 = sadd.s32 %s464, %s23
      %p466 = scmp.lt.s32.totalorder %s465, 7
      %s467 = scalar_select %p466, %s465, 7
      %s468 = smul.addr %s467, 2
      %s469 = scalar_lea.vmem %s3, %s468
      %s470 = smul.u32 %s22, 4
      %s471 = sadd.s32 %s470, %s23
      %s472 = smul.u32 %s22, 4
      %s473 = sadd.s32 %s472, %s23
      %p474 = scmp.lt.s32.totalorder %s473, 7
      %s475 = scalar_select %p474, %s473, 7
      %s476 = smul.addr %s475, 64
      %s477 = smul.addr %s476, 4
      %s478 = scalar_lea.vmem %s4, %s477
      %s479 = smul.u32 %s22, 4
      %s480 = sadd.s32 %s479, %s23
      %s481 = smul.u32 %s22, 4
      %s482 = sadd.s32 %s481, %s23
      %p483 = scmp.lt.s32.totalorder %s482, 7
      %s484 = scalar_select %p483, %s482, 7
      %s485 = smul.addr %s484, 2
      %s486 = scalar_lea.vmem %s5, %s485
      %s487 = smul.u32 %s22, 4
      %s488 = sadd.s32 %s487, %s23
      %s489 = smul.u32 %s22, 4
      %s490 = sadd.s32 %s489, %s23
      %p491 = scmp.lt.s32.totalorder %s490, 7
      %s492 = scalar_select %p491, %s490, 7
      %s493 = smul.addr %s492, 32
      %s494 = smul.addr %s493, 4
      %s495 = scalar_lea.vmem %s6, %s494
      %s496 = smul.u32 %s22, 4
      %s497 = sadd.s32 %s496, %s23
      %p498 = scmp.lt.s32.totalorder %s22, 1
      %s499 = scalar_select %p498, %s22, 1
      %s500 = smul.addr %s499, 2
      %s501 = smul.addr %s500, 8
      %s502 = scalar_lea.vmem %s7, %s501
      %p504 = scmp.eq.s32.totalorder %s23, 0
      // Predicated region
      $region49: #{_forward_core.1} parent=47 // pred_check
        %p505 = pneg %p504
      $region50: #{_forward_core.1} parent=47 // pred_check_branch
        %507 = sbr.rel (%p505) target = $region52
      $region51: #{_forward_core.1} parent=47 // pred_region
        %508 = vst [vmem:[%s502] sm:$0xff] 0.0
        %509 = vst [vmem:[%s502 + $0x8] sm:$0xff] 0.0
      $region52: #{_forward_core.1} parent=47 // pred_fallthru
        _
      %v510 = vld [vmem:[%s443] sm:$0xff]
      %v511 = vld [vmem:[%s443 + $0x8] sm:$0xff]
      %v512 = vld [vmem:[%s443 + $0x10] sm:$0xff]
      %v513 = vld [vmem:[%s443 + $0x18] sm:$0xff]
      %v514 = vld [vmem:[%s443 + $0x20] sm:$0xff]
      %v515 = vld [vmem:[%s443 + $0x28] sm:$0xff]
      %v516 = vld [vmem:[%s461] sm:$0xff]
      %v517 = vld [vmem:[%s461 + $0x8] sm:$0xff]
      %v518 = vld [vmem:[%s461 + $0x10] sm:$0xff]
      %v519 = vld [vmem:[%s461 + $0x18] sm:$0xff]
      %v520 = vld [vmem:[%s461 + $0x20] sm:$0xff]
      %v521 = vld [vmem:[%s461 + $0x28] sm:$0xff]
      %v522 = vld [vmem:[%s461 + $0x30] sm:$0xff]
      %v523 = vld [vmem:[%s461 + $0x38] sm:$0xff]
      %v524 = vld [vmem:[%s461 + $0x40] sm:$0xff]
      %v525 = vld [vmem:[%s461 + $0x48] sm:$0xff]
      %v526 = vld [vmem:[%s461 + $0x50] sm:$0xff]
      %v527 = vld [vmem:[%s461 + $0x58] sm:$0xff]
      %v528 = vld [vmem:[%s461 + $0x60] sm:$0xff]
      %v529 = vld [vmem:[%s461 + $0x68] sm:$0xff]
      %v530 = vld [vmem:[%s461 + $0x70] sm:$0xff]
      %v531 = vld [vmem:[%s461 + $0x78] sm:$0xff]
      %v532 = vld [vmem:[%s461 + $0x80] sm:$0xff]
      %v533 = vld [vmem:[%s461 + $0x88] sm:$0xff]
      %v534 = vld [vmem:[%s461 + $0x90] sm:$0xff]
      %v535 = vld [vmem:[%s461 + $0x98] sm:$0xff]
      %v536 = vld [vmem:[%s461 + $0xa0] sm:$0xff]
      %v537 = vld [vmem:[%s461 + $0xa8] sm:$0xff]
      %v538 = vld [vmem:[%s461 + $0xb0] sm:$0xff]
      %v539 = vld [vmem:[%s461 + $0xb8] sm:$0xff]
      %v540 = vld [vmem:[%s461 + $0xc0] sm:$0xff]
      %v541 = vld [vmem:[%s461 + $0xc8] sm:$0xff]
      %v542 = vld [vmem:[%s461 + $0xd0] sm:$0xff]
      %v543 = vld [vmem:[%s461 + $0xd8] sm:$0xff]
      %v544 = vld [vmem:[%s461 + $0xe0] sm:$0xff]
      %v545 = vld [vmem:[%s461 + $0xe8] sm:$0xff]
      %v546 = vld [vmem:[%s461 + $0xf0] sm:$0xff]
      %v547 = vld [vmem:[%s461 + $0xf8] sm:$0xff]
      %v548 = vld [vmem:[%s469] sm:$0x3]
      %v550 = vlaneseq
      %v551 = vshrl.u32 %v550, 7
      %v552 = vsub.s32 0, %v551
      %v553 = vrot.slane %v548, %v552
      %v554 = vlaneseq
      %v555 = vshrl.u32 %v554, 7
      %v556 = vsub.s32 1, %v555
      %v557 = vrot.slane %v548, %v556
      %v566 = vunpack.c.l.b16 %v510
      %v567 = vunpack.c.h.b16 %v510
      %v568 = vunpack.c.l.b16 %v511
      %v569 = vunpack.c.h.b16 %v511
      %v570 = vunpack.c.l.b16 %v512
      %v571 = vunpack.c.h.b16 %v512
      %v572 = vunpack.c.l.b16 %v513
      %v573 = vunpack.c.h.b16 %v513
      %v574 = vunpack.c.l.b16 %v514
      %v575 = vunpack.c.h.b16 %v514
      %v576 = vunpack.c.l.b16 %v515
      %v577 = vunpack.c.h.b16 %v515
      %v578 = vpack.c.b16 %v568, %v566
      %v579 = vpack.c.b16 %v569, %v567
      %v580 = vpack.c.b16 %v572, %v570
      %v581 = vpack.c.b16 %v573, %v571
      %v582 = vpack.c.b16 %v576, %v574
      %v583 = vpack.c.b16 %v577, %v575
      %v622 = vunpack.c.l.b16 %v516
      %v623 = vunpack.c.h.b16 %v516
      %v624 = vunpack.c.l.b16 %v517
      %v625 = vunpack.c.h.b16 %v517
      %v626 = vunpack.c.l.b16 %v518
      %v627 = vunpack.c.h.b16 %v518
      %v628 = vunpack.c.l.b16 %v519
      %v629 = vunpack.c.h.b16 %v519
      %v630 = vunpack.c.l.b16 %v520
      %v631 = vunpack.c.h.b16 %v520
      %v632 = vunpack.c.l.b16 %v521
      %v633 = vunpack.c.h.b16 %v521
      %v634 = vunpack.c.l.b16 %v522
      %v635 = vunpack.c.h.b16 %v522
      %v636 = vunpack.c.l.b16 %v523
      %v637 = vunpack.c.h.b16 %v523
      %v638 = vunpack.c.l.b16 %v524
      %v639 = vunpack.c.h.b16 %v524
      %v640 = vunpack.c.l.b16 %v525
      %v641 = vunpack.c.h.b16 %v525
      %v642 = vunpack.c.l.b16 %v526
      %v643 = vunpack.c.h.b16 %v526
      %v644 = vunpack.c.l.b16 %v527
      %v645 = vunpack.c.h.b16 %v527
      %v646 = vunpack.c.l.b16 %v528
      %v647 = vunpack.c.h.b16 %v528
      %v648 = vunpack.c.l.b16 %v529
      %v649 = vunpack.c.h.b16 %v529
      %v650 = vunpack.c.l.b16 %v530
      %v651 = vunpack.c.h.b16 %v530
      %v652 = vunpack.c.l.b16 %v531
      %v653 = vunpack.c.h.b16 %v531
      %v654 = vunpack.c.l.b16 %v532
      %v655 = vunpack.c.h.b16 %v532
      %v656 = vunpack.c.l.b16 %v533
      %v657 = vunpack.c.h.b16 %v533
      %v658 = vunpack.c.l.b16 %v534
      %v659 = vunpack.c.h.b16 %v534
      %v660 = vunpack.c.l.b16 %v535
      %v661 = vunpack.c.h.b16 %v535
      %v662 = vunpack.c.l.b16 %v536
      %v663 = vunpack.c.h.b16 %v536
      %v664 = vunpack.c.l.b16 %v537
      %v665 = vunpack.c.h.b16 %v537
      %v666 = vunpack.c.l.b16 %v538
      %v667 = vunpack.c.h.b16 %v538
      %v668 = vunpack.c.l.b16 %v539
      %v669 = vunpack.c.h.b16 %v539
      %v670 = vunpack.c.l.b16 %v540
      %v671 = vunpack.c.h.b16 %v540
      %v672 = vunpack.c.l.b16 %v541
      %v673 = vunpack.c.h.b16 %v541
      %v674 = vunpack.c.l.b16 %v542
      %v675 = vunpack.c.h.b16 %v542
      %v676 = vunpack.c.l.b16 %v543
      %v677 = vunpack.c.h.b16 %v543
      %v678 = vunpack.c.l.b16 %v544
      %v679 = vunpack.c.h.b16 %v544
      %v680 = vunpack.c.l.b16 %v545
      %v681 = vunpack.c.h.b16 %v545
      %v682 = vunpack.c.l.b16 %v546
      %v683 = vunpack.c.h.b16 %v546
      %v684 = vunpack.c.l.b16 %v547
      %v685 = vunpack.c.h.b16 %v547
      %v686 = vpack.c.b16 %v624, %v622
      %v687 = vpack.c.b16 %v625, %v623
      %v688 = vpack.c.b16 %v628, %v626
      %v689 = vpack.c.b16 %v629, %v627
      %v690 = vpack.c.b16 %v632, %v630
      %v691 = vpack.c.b16 %v633, %v631
      %v692 = vpack.c.b16 %v636, %v634
      %v693 = vpack.c.b16 %v637, %v635
      %v694 = vpack.c.b16 %v640, %v638
      %v695 = vpack.c.b16 %v641, %v639
      %v696 = vpack.c.b16 %v644, %v642
      %v697 = vpack.c.b16 %v645, %v643
      %v698 = vpack.c.b16 %v648, %v646
      %v699 = vpack.c.b16 %v649, %v647
      %v700 = vpack.c.b16 %v652, %v650
      %v701 = vpack.c.b16 %v653, %v651
      %v702 = vpack.c.b16 %v656, %v654
      %v703 = vpack.c.b16 %v657, %v655
      %v704 = vpack.c.b16 %v660, %v658
      %v705 = vpack.c.b16 %v661, %v659
      %v706 = vpack.c.b16 %v664, %v662
      %v707 = vpack.c.b16 %v665, %v663
      %v708 = vpack.c.b16 %v668, %v666
      %v709 = vpack.c.b16 %v669, %v667
      %v710 = vpack.c.b16 %v672, %v670
      %v711 = vpack.c.b16 %v673, %v671
      %v712 = vpack.c.b16 %v676, %v674
      %v713 = vpack.c.b16 %v677, %v675
      %v714 = vpack.c.b16 %v680, %v678
      %v715 = vpack.c.b16 %v681, %v679
      %v716 = vpack.c.b16 %v684, %v682
      %v717 = vpack.c.b16 %v685, %v683
      %750 = vmatprep.subr.bf16.mxu0 %v687
      %751 = vmatpush1.bf16.msra.mxu0 %v686
      %752 = vmatprep.subr.bf16.mxu0 %v689
      %753 = vmatpush1.bf16.msra.mxu0 %v688
      %754 = vmatprep.subr.bf16.mxu0 %v691
      %755 = vmatpush1.bf16.msra.mxu0 %v690
      %756 = vmatprep.subr.bf16.mxu0 %v693
      %757 = vmatpush1.bf16.msra.mxu0 %v692
      %758 = vmatprep.subr.bf16.mxu0 %v695
      %759 = vmatpush1.bf16.msra.mxu0 %v694
      %760 = vmatprep.subr.bf16.mxu0 %v697
      %761 = vmatpush1.bf16.msra.mxu0 %v696
      %762 = vmatprep.subr.bf16.mxu0 %v699
      %763 = vmatpush1.bf16.msra.mxu0 %v698
      %764 = vmatprep.subr.bf16.mxu0 %v701
      %765 = vmatpush1.bf16.msra.mxu0 %v700
      %766 = vmatprep.subr.bf16.mxu0 %v703
      %767 = vmatpush1.bf16.msra.mxu0 %v702
      %768 = vmatprep.subr.bf16.mxu0 %v705
      %769 = vmatpush1.bf16.msra.mxu0 %v704
      %770 = vmatprep.subr.bf16.mxu0 %v707
      %771 = vmatpush1.bf16.msra.mxu0 %v706
      %772 = vmatprep.subr.bf16.mxu0 %v709
      %773 = vmatpush1.bf16.msra.mxu0 %v708
      %774 = vmatprep.subr.bf16.mxu0 %v711
      %775 = vmatpush1.bf16.msra.mxu0 %v710
      %776 = vmatprep.subr.bf16.mxu0 %v713
      %777 = vmatpush1.bf16.msra.mxu0 %v712
      %778 = vmatprep.subr.bf16.mxu0 %v715
      %779 = vmatpush1.bf16.msra.mxu0 %v714
      %780 = vmatprep.subr.bf16.mxu0 %v717
      %781 = vmatpush1.bf16.msra.mxu0 %v716
      %782 = vmatprep.mubr.bf16.mxu0 %v579
      %783 = vmatmul.mubr.bf16.gmra.mrb[0].mxu0 %v578
      %v784 = vpop.f32.mrb[0].mxu0
      %v785 = vadd.f32 %v553, %v784
      %v786 = vpop.f32.mrb[0].mxu0
      %v787 = vadd.f32 %v557, %v786
      %v788 = vpop.f32.mrb[0].mxu0
      %v789 = vadd.f32 %v553, %v788
      %v790 = vpop.f32.mrb[0].mxu0
      %v791 = vadd.f32 %v557, %v790
      %792 = vmatprep.mubr.bf16.mxu0 %v581
      %793 = vmatmul.mubr.bf16.gmra.mrb[0].mxu0 %v580
      %v794 = vpop.f32.mrb[0].mxu0
      %v795 = vadd.f32 %v553, %v794
      %v796 = vpop.f32.mrb[0].mxu0
      %v797 = vadd.f32 %v557, %v796
      %v798 = vpop.f32.mrb[0].mxu0
      %v799 = vadd.f32 %v553, %v798
      %v800 = vpop.f32.mrb[0].mxu0
      %v801 = vadd.f32 %v557, %v800
      %802 = vmatprep.mubr.bf16.mxu0 %v583
      %803 = vmatmul.mubr.bf16.gmra.mrb[0].mxu0 %v582
      %v804 = vpop.f32.mrb[0].mxu0
      %v805 = vadd.f32 %v553, %v804
      %v806 = vpop.f32.mrb[0].mxu0
      %v807 = vadd.f32 %v557, %v806
      %v808 = vpop.f32.mrb[0].mxu0
      %v809 = vadd.f32 %v553, %v808
      %v810 = vpop.f32.mrb[0].mxu0
      %v811 = vadd.f32 %v557, %v810
      %812 = vdwg.mxu0
      %v813 = vmax.f32 %v785, 0.0
      %v814 = vmax.f32 %v787, 0.0
      %v815 = vmax.f32 %v789, 0.0
      %v816 = vmax.f32 %v791, 0.0
      %v817 = vmax.f32 %v795, 0.0
      %v818 = vmax.f32 %v797, 0.0
      %v819 = vmax.f32 %v799, 0.0
      %v820 = vmax.f32 %v801, 0.0
      %v821 = vmax.f32 %v805, 0.0
      %v822 = vmax.f32 %v807, 0.0
      %v823 = vmax.f32 %v809, 0.0
      %v824 = vmax.f32 %v811, 0.0
      %v825 = vpack.c.bf16 %v815, %v813
      %v826 = vpack.c.bf16 %v816, %v814
      %v827 = vpack.c.bf16 %v819, %v817
      %v828 = vpack.c.bf16 %v820, %v818
      %v829 = vpack.c.bf16 %v823, %v821
      %v830 = vpack.c.bf16 %v824, %v822
      %v831 = vld [vmem:[%s478] sm:$0xff]
      %v832 = vld [vmem:[%s478 + $0x8] sm:$0xff]
      %v833 = vld [vmem:[%s478 + $0x10] sm:$0xff]
      %v834 = vld [vmem:[%s478 + $0x18] sm:$0xff]
      %v835 = vld [vmem:[%s478 + $0x20] sm:$0xff]
      %v836 = vld [vmem:[%s478 + $0x28] sm:$0xff]
      %v837 = vld [vmem:[%s478 + $0x30] sm:$0xff]
      %v838 = vld [vmem:[%s478 + $0x38] sm:$0xff]
      %v839 = vld [vmem:[%s478 + $0x40] sm:$0xff]
      %v840 = vld [vmem:[%s478 + $0x48] sm:$0xff]
      %v841 = vld [vmem:[%s478 + $0x50] sm:$0xff]
      %v842 = vld [vmem:[%s478 + $0x58] sm:$0xff]
      %v843 = vld [vmem:[%s478 + $0x60] sm:$0xff]
      %v844 = vld [vmem:[%s478 + $0x68] sm:$0xff]
      %v845 = vld [vmem:[%s478 + $0x70] sm:$0xff]
      %v846 = vld [vmem:[%s478 + $0x78] sm:$0xff]
      %v847 = vld [vmem:[%s478 + $0x80] sm:$0xff]
      %v848 = vld [vmem:[%s478 + $0x88] sm:$0xff]
      %v849 = vld [vmem:[%s478 + $0x90] sm:$0xff]
      %v850 = vld [vmem:[%s478 + $0x98] sm:$0xff]
      %v851 = vld [vmem:[%s478 + $0xa0] sm:$0xff]
      %v852 = vld [vmem:[%s478 + $0xa8] sm:$0xff]
      %v853 = vld [vmem:[%s478 + $0xb0] sm:$0xff]
      %v854 = vld [vmem:[%s478 + $0xb8] sm:$0xff]
      %v855 = vld [vmem:[%s478 + $0xc0] sm:$0xff]
      %v856 = vld [vmem:[%s478 + $0xc8] sm:$0xff]
      %v857 = vld [vmem:[%s478 + $0xd0] sm:$0xff]
      %v858 = vld [vmem:[%s478 + $0xd8] sm:$0xff]
      %v859 = vld [vmem:[%s478 + $0xe0] sm:$0xff]
      %v860 = vld [vmem:[%s478 + $0xe8] sm:$0xff]
      %v861 = vld [vmem:[%s478 + $0xf0] sm:$0xff]
      %v862 = vld [vmem:[%s478 + $0xf8] sm:$0xff]
      %v863 = vld [vmem:[%s486] sm:$0x3]
      %v865 = vlaneseq
      %v866 = vshrl.u32 %v865, 7
      %v867 = vsub.s32 0, %v866
      %v868 = vrot.slane %v863, %v867
      %v869 = vlaneseq
      %v870 = vshrl.u32 %v869, 7
      %v871 = vsub.s32 1, %v870
      %v872 = vrot.slane %v863, %v871
      %v907 = vunpack.c.l.b16 %v831
      %v908 = vunpack.c.h.b16 %v831
      %v909 = vunpack.c.l.b16 %v832
      %v910 = vunpack.c.h.b16 %v832
      %v911 = vunpack.c.l.b16 %v833
      %v912 = vunpack.c.h.b16 %v833
      %v913 = vunpack.c.l.b16 %v834
      %v914 = vunpack.c.h.b16 %v834
      %v915 = vunpack.c.l.b16 %v835
      %v916 = vunpack.c.h.b16 %v835
      %v917 = vunpack.c.l.b16 %v836
      %v918 = vunpack.c.h.b16 %v836
      %v919 = vunpack.c.l.b16 %v837
      %v920 = vunpack.c.h.b16 %v837
      %v921 = vunpack.c.l.b16 %v838
      %v922 = vunpack.c.h.b16 %v838
      %v923 = vunpack.c.l.b16 %v839
      %v924 = vunpack.c.h.b16 %v839
      %v925 = vunpack.c.l.b16 %v840
      %v926 = vunpack.c.h.b16 %v840
      %v927 = vunpack.c.l.b16 %v841
      %v928 = vunpack.c.h.b16 %v841
      %v929 = vunpack.c.l.b16 %v842
      %v930 = vunpack.c.h.b16 %v842
      %v931 = vunpack.c.l.b16 %v843
      %v932 = vunpack.c.h.b16 %v843
      %v933 = vunpack.c.l.b16 %v844
      %v934 = vunpack.c.h.b16 %v844
      %v935 = vunpack.c.l.b16 %v845
      %v936 = vunpack.c.h.b16 %v845
      %v937 = vunpack.c.l.b16 %v846
      %v938 = vunpack.c.h.b16 %v846
      %v939 = vunpack.c.l.b16 %v847
      %v940 = vunpack.c.h.b16 %v847
      %v941 = vunpack.c.l.b16 %v848
      %v942 = vunpack.c.h.b16 %v848
      %v943 = vunpack.c.l.b16 %v849
      %v944 = vunpack.c.h.b16 %v849
      %v945 = vunpack.c.l.b16 %v850
      %v946 = vunpack.c.h.b16 %v850
      %v947 = vunpack.c.l.b16 %v851
      %v948 = vunpack.c.h.b16 %v851
      %v949 = vunpack.c.l.b16 %v852
      %v950 = vunpack.c.h.b16 %v852
      %v951 = vunpack.c.l.b16 %v853
      %v952 = vunpack.c.h.b16 %v853
      %v953 = vunpack.c.l.b16 %v854
      %v954 = vunpack.c.h.b16 %v854
      %v955 = vunpack.c.l.b16 %v855
      %v956 = vunpack.c.h.b16 %v855
      %v957 = vunpack.c.l.b16 %v856
      %v958 = vunpack.c.h.b16 %v856
      %v959 = vunpack.c.l.b16 %v857
      %v960 = vunpack.c.h.b16 %v857
      %v961 = vunpack.c.l.b16 %v858
      %v962 = vunpack.c.h.b16 %v858
      %v963 = vunpack.c.l.b16 %v859
      %v964 = vunpack.c.h.b16 %v859
      %v965 = vunpack.c.l.b16 %v860
      %v966 = vunpack.c.h.b16 %v860
      %v967 = vunpack.c.l.b16 %v861
      %v968 = vunpack.c.h.b16 %v861
      %v969 = vunpack.c.l.b16 %v862
      %v970 = vunpack.c.h.b16 %v862
      %v971 = vpack.c.b16 %v909, %v907
      %v972 = vpack.c.b16 %v910, %v908
      %v973 = vpack.c.b16 %v913, %v911
      %v974 = vpack.c.b16 %v914, %v912
      %v975 = vpack.c.b16 %v917, %v915
      %v976 = vpack.c.b16 %v918, %v916
      %v977 = vpack.c.b16 %v921, %v919
      %v978 = vpack.c.b16 %v922, %v920
      %v979 = vpack.c.b16 %v925, %v923
      %v980 = vpack.c.b16 %v926, %v924
      %v981 = vpack.c.b16 %v929, %v927
      %v982 = vpack.c.b16 %v930, %v928
      %v983 = vpack.c.b16 %v933, %v931
      %v984 = vpack.c.b16 %v934, %v932
      %v985 = vpack.c.b16 %v937, %v935
      %v986 = vpack.c.b16 %v938, %v936
      %v987 = vpack.c.b16 %v941, %v939
      %v988 = vpack.c.b16 %v942, %v940
      %v989 = vpack.c.b16 %v945, %v943
      %v990 = vpack.c.b16 %v946, %v944
      %v991 = vpack.c.b16 %v949, %v947
      %v992 = vpack.c.b16 %v950, %v948
      %v993 = vpack.c.b16 %v953, %v951
      %v994 = vpack.c.b16 %v954, %v952
      %v995 = vpack.c.b16 %v957, %v955
      %v996 = vpack.c.b16 %v958, %v956
      %v997 = vpack.c.b16 %v961, %v959
      %v998 = vpack.c.b16 %v962, %v960
      %v999 = vpack.c.b16 %v965, %v963
      %v1000 = vpack.c.b16 %v966, %v964
      %v1001 = vpack.c.b16 %v969, %v967
      %v1002 = vpack.c.b16 %v970, %v968
      %1035 = vmatprep.subr.bf16.mxu0 %v972
      %1036 = vmatpush1.bf16.msra.mxu0 %v971
      %1037 = vmatprep.subr.bf16.mxu0 %v974
      %1038 = vmatpush1.bf16.msra.mxu0 %v973
      %1039 = vmatprep.subr.bf16.mxu0 %v976
      %1040 = vmatpush1.bf16.msra.mxu0 %v975
      %1041 = vmatprep.subr.bf16.mxu0 %v978
      %1042 = vmatpush1.bf16.msra.mxu0 %v977
      %1043 = vmatprep.subr.bf16.mxu0 %v980
      %1044 = vmatpush1.bf16.msra.mxu0 %v979
      %1045 = vmatprep.subr.bf16.mxu0 %v982
      %1046 = vmatpush1.bf16.msra.mxu0 %v981
      %1047 = vmatprep.subr.bf16.mxu0 %v984
      %1048 = vmatpush1.bf16.msra.mxu0 %v983
      %1049 = vmatprep.subr.bf16.mxu0 %v986
      %1050 = vmatpush1.bf16.msra.mxu0 %v985
      %1051 = vmatprep.subr.bf16.mxu0 %v988
      %1052 = vmatpush1.bf16.msra.mxu0 %v987
      %1053 = vmatprep.subr.bf16.mxu0 %v990
      %1054 = vmatpush1.bf16.msra.mxu0 %v989
      %1055 = vmatprep.subr.bf16.mxu0 %v992
      %1056 = vmatpush1.bf16.msra.mxu0 %v991
      %1057 = vmatprep.subr.bf16.mxu0 %v994
      %1058 = vmatpush1.bf16.msra.mxu0 %v993
      %1059 = vmatprep.subr.bf16.mxu0 %v996
      %1060 = vmatpush1.bf16.msra.mxu0 %v995
      %1061 = vmatprep.subr.bf16.mxu0 %v998
      %1062 = vmatpush1.bf16.msra.mxu0 %v997
      %1063 = vmatprep.subr.bf16.mxu0 %v1000
      %1064 = vmatpush1.bf16.msra.mxu0 %v999
      %1065 = vmatprep.subr.bf16.mxu0 %v1002
      %1066 = vmatpush1.bf16.msra.mxu0 %v1001
      %1067 = vmatprep.mubr.bf16.mxu0 %v826
      %1068 = vmatmul.mubr.bf16.gmra.mrb[0].mxu0 %v825
      %v1069 = vpop.f32.mrb[0].mxu0
      %v1070 = vadd.f32 %v868, %v1069
      %v1071 = vpop.f32.mrb[0].mxu0
      %v1072 = vadd.f32 %v872, %v1071
      %v1073 = vpop.f32.mrb[0].mxu0
      %v1074 = vadd.f32 %v868, %v1073
      %v1075 = vpop.f32.mrb[0].mxu0
      %v1076 = vadd.f32 %v872, %v1075
      %1077 = vmatprep.mubr.bf16.mxu0 %v828
      %1078 = vmatmul.mubr.bf16.gmra.mrb[0].mxu0 %v827
      %v1079 = vpop.f32.mrb[0].mxu0
      %v1080 = vadd.f32 %v868, %v1079
      %v1081 = vpop.f32.mrb[0].mxu0
      %v1082 = vadd.f32 %v872, %v1081
      %v1083 = vpop.f32.mrb[0].mxu0
      %v1084 = vadd.f32 %v868, %v1083
      %v1085 = vpop.f32.mrb[0].mxu0
      %v1086 = vadd.f32 %v872, %v1085
      %1087 = vmatprep.mubr.bf16.mxu0 %v830
      %1088 = vmatmul.mubr.bf16.gmra.mrb[0].mxu0 %v829
      %v1089 = vpop.f32.mrb[0].mxu0
      %v1090 = vadd.f32 %v868, %v1089
      %v1091 = vpop.f32.mrb[0].mxu0
      %v1092 = vadd.f32 %v872, %v1091
      %v1093 = vpop.f32.mrb[0].mxu0
      %v1094 = vadd.f32 %v868, %v1093
      %v1095 = vpop.f32.mrb[0].mxu0
      %v1096 = vadd.f32 %v872, %v1095
      %1097 = vdwg.mxu0
      %v1098 = vmax.f32 %v1070, 0.0
      %v1099 = vmax.f32 %v1072, 0.0
      %v1100 = vmax.f32 %v1074, 0.0
      %v1101 = vmax.f32 %v1076, 0.0
      %v1102 = vmax.f32 %v1080, 0.0
      %v1103 = vmax.f32 %v1082, 0.0
      %v1104 = vmax.f32 %v1084, 0.0
      %v1105 = vmax.f32 %v1086, 0.0
      %v1106 = vmax.f32 %v1090, 0.0
      %v1107 = vmax.f32 %v1092, 0.0
      %v1108 = vmax.f32 %v1094, 0.0
      %v1109 = vmax.f32 %v1096, 0.0
      %v1110 = vpack.c.bf16 %v1100, %v1098
      %v1111 = vpack.c.bf16 %v1101, %v1099
      %v1112 = vpack.c.bf16 %v1104, %v1102
      %v1113 = vpack.c.bf16 %v1105, %v1103
      %v1114 = vpack.c.bf16 %v1108, %v1106
      %v1115 = vpack.c.bf16 %v1109, %v1107
      %v1116 = vld [vmem:[%s495] sm:$0xf]
      %v1117 = vld [vmem:[%s495 + $0x4] sm:$0xf]
      %v1118 = vld [vmem:[%s495 + $0x8] sm:$0xf]
      %v1119 = vld [vmem:[%s495 + $0xc] sm:$0xf]
      %v1120 = vld [vmem:[%s495 + $0x10] sm:$0xf]
      %v1121 = vld [vmem:[%s495 + $0x14] sm:$0xf]
      %v1122 = vld [vmem:[%s495 + $0x18] sm:$0xf]
      %v1123 = vld [vmem:[%s495 + $0x1c] sm:$0xf]
      %v1124 = vld [vmem:[%s495 + $0x20] sm:$0xf]
      %v1125 = vld [vmem:[%s495 + $0x24] sm:$0xf]
      %v1126 = vld [vmem:[%s495 + $0x28] sm:$0xf]
      %v1127 = vld [vmem:[%s495 + $0x2c] sm:$0xf]
      %v1128 = vld [vmem:[%s495 + $0x30] sm:$0xf]
      %v1129 = vld [vmem:[%s495 + $0x34] sm:$0xf]
      %v1130 = vld [vmem:[%s495 + $0x38] sm:$0xf]
      %v1131 = vld [vmem:[%s495 + $0x3c] sm:$0xf]
      %v1132 = vld [vmem:[%s495 + $0x40] sm:$0xf]
      %v1133 = vld [vmem:[%s495 + $0x44] sm:$0xf]
      %v1134 = vld [vmem:[%s495 + $0x48] sm:$0xf]
      %v1135 = vld [vmem:[%s495 + $0x4c] sm:$0xf]
      %v1136 = vld [vmem:[%s495 + $0x50] sm:$0xf]
      %v1137 = vld [vmem:[%s495 + $0x54] sm:$0xf]
      %v1138 = vld [vmem:[%s495 + $0x58] sm:$0xf]
      %v1139 = vld [vmem:[%s495 + $0x5c] sm:$0xf]
      %v1140 = vld [vmem:[%s495 + $0x60] sm:$0xf]
      %v1141 = vld [vmem:[%s495 + $0x64] sm:$0xf]
      %v1142 = vld [vmem:[%s495 + $0x68] sm:$0xf]
      %v1143 = vld [vmem:[%s495 + $0x6c] sm:$0xf]
      %v1144 = vld [vmem:[%s495 + $0x70] sm:$0xf]
      %v1145 = vld [vmem:[%s495 + $0x74] sm:$0xf]
      %v1146 = vld [vmem:[%s495 + $0x78] sm:$0xf]
      %v1147 = vld [vmem:[%s495 + $0x7c] sm:$0xf]
      %v1180 = vunpack.c.l.b16 %v1116
      %v1181 = vunpack.c.l.b16 %v1117
      %v1182 = vunpack.c.l.b16 %v1118
      %v1183 = vunpack.c.l.b16 %v1119
      %v1184 = vunpack.c.l.b16 %v1120
      %v1185 = vunpack.c.l.b16 %v1121
      %v1186 = vunpack.c.l.b16 %v1122
      %v1187 = vunpack.c.l.b16 %v1123
      %v1188 = vunpack.c.l.b16 %v1124
      %v1189 = vunpack.c.l.b16 %v1125
      %v1190 = vunpack.c.l.b16 %v1126
      %v1191 = vunpack.c.l.b16 %v1127
      %v1192 = vunpack.c.l.b16 %v1128
      %v1193 = vunpack.c.l.b16 %v1129
      %v1194 = vunpack.c.l.b16 %v1130
      %v1195 = vunpack.c.l.b16 %v1131
      %v1196 = vunpack.c.l.b16 %v1132
      %v1197 = vunpack.c.l.b16 %v1133
      %v1198 = vunpack.c.l.b16 %v1134
      %v1199 = vunpack.c.l.b16 %v1135
      %v1200 = vunpack.c.l.b16 %v1136
      %v1201 = vunpack.c.l.b16 %v1137
      %v1202 = vunpack.c.l.b16 %v1138
      %v1203 = vunpack.c.l.b16 %v1139
      %v1204 = vunpack.c.l.b16 %v1140
      %v1205 = vunpack.c.l.b16 %v1141
      %v1206 = vunpack.c.l.b16 %v1142
      %v1207 = vunpack.c.l.b16 %v1143
      %v1208 = vunpack.c.l.b16 %v1144
      %v1209 = vunpack.c.l.b16 %v1145
      %v1210 = vunpack.c.l.b16 %v1146
      %v1211 = vunpack.c.l.b16 %v1147
      %v1212 = vpack.c.b16 %v1181, %v1180
      %v1213 = vpack.c.b16 %v1183, %v1182
      %v1214 = vpack.c.b16 %v1185, %v1184
      %v1215 = vpack.c.b16 %v1187, %v1186
      %v1216 = vpack.c.b16 %v1189, %v1188
      %v1217 = vpack.c.b16 %v1191, %v1190
      %v1218 = vpack.c.b16 %v1193, %v1192
      %v1219 = vpack.c.b16 %v1195, %v1194
      %v1220 = vpack.c.b16 %v1197, %v1196
      %v1221 = vpack.c.b16 %v1199, %v1198
      %v1222 = vpack.c.b16 %v1201, %v1200
      %v1223 = vpack.c.b16 %v1203, %v1202
      %v1224 = vpack.c.b16 %v1205, %v1204
      %v1225 = vpack.c.b16 %v1207, %v1206
      %v1226 = vpack.c.b16 %v1209, %v1208
      %v1227 = vpack.c.b16 %v1211, %v1210
      %1244 = vmatprep.subr.bf16.mxu0 0
      %1245 = vmatpush1.bf16.msra.mxu0 %v1212
      %1246 = vmatprep.subr.bf16.mxu0 0
      %1247 = vmatpush1.bf16.msra.mxu0 %v1213
      %1248 = vmatprep.subr.bf16.mxu0 0
      %1249 = vmatpush1.bf16.msra.mxu0 %v1214
      %1250 = vmatprep.subr.bf16.mxu0 0
      %1251 = vmatpush1.bf16.msra.mxu0 %v1215
      %1252 = vmatprep.subr.bf16.mxu0 0
      %1253 = vmatpush1.bf16.msra.mxu0 %v1216
      %1254 = vmatprep.subr.bf16.mxu0 0
      %1255 = vmatpush1.bf16.msra.mxu0 %v1217
      %1256 = vmatprep.subr.bf16.mxu0 0
      %1257 = vmatpush1.bf16.msra.mxu0 %v1218
      %1258 = vmatprep.subr.bf16.mxu0 0
      %1259 = vmatpush1.bf16.msra.mxu0 %v1219
      %1260 = vmatprep.subr.bf16.mxu0 0
      %1261 = vmatpush1.bf16.msra.mxu0 %v1220
      %1262 = vmatprep.subr.bf16.mxu0 0
      %1263 = vmatpush1.bf16.msra.mxu0 %v1221
      %1264 = vmatprep.subr.bf16.mxu0 0
      %1265 = vmatpush1.bf16.msra.mxu0 %v1222
      %1266 = vmatprep.subr.bf16.mxu0 0
      %1267 = vmatpush1.bf16.msra.mxu0 %v1223
      %1268 = vmatprep.subr.bf16.mxu0 0
      %1269 = vmatpush1.bf16.msra.mxu0 %v1224
      %1270 = vmatprep.subr.bf16.mxu0 0
      %1271 = vmatpush1.bf16.msra.mxu0 %v1225
      %1272 = vmatprep.subr.bf16.mxu0 0
      %1273 = vmatpush1.bf16.msra.mxu0 %v1226
      %1274 = vmatprep.subr.bf16.mxu0 0
      %1275 = vmatpush1.bf16.msra.mxu0 %v1227
      %1276 = vmatprep.mubr.bf16.mxu0 %v1111
      %1277 = vmatmul.mubr.bf16.gmra.mrb[0].mxu0 %v1110
      %v1278 = vpop.f32.mrb[0].mxu0
      %v1279 = vadd.f32 0.0, %v1278
      %v1280 = vpop.f32.mrb[0].mxu0
      %v1281 = vpop.f32.mrb[0].mxu0
      %v1282 = vadd.f32 0.0, %v1281
      %v1283 = vpop.f32.mrb[0].mxu0
      %1284 = vmatprep.mubr.bf16.mxu0 %v1113
      %1285 = vmatmul.mubr.bf16.gmra.mrb[0].mxu0 %v1112
      %v1286 = vpop.f32.mrb[0].mxu0
      %v1287 = vadd.f32 0.0, %v1286
      %v1288 = vpop.f32.mrb[0].mxu0
      %v1289 = vpop.f32.mrb[0].mxu0
      %v1290 = vadd.f32 0.0, %v1289
      %v1291 = vpop.f32.mrb[0].mxu0
      %1292 = vmatprep.mubr.bf16.mxu0 %v1115
      %1293 = vmatmul.mubr.bf16.gmra.mrb[0].mxu0 %v1114
      %v1294 = vpop.f32.mrb[0].mxu0
      %v1295 = vadd.f32 0.0, %v1294
      %v1296 = vpop.f32.mrb[0].mxu0
      %v1297 = vpop.f32.mrb[0].mxu0
      %v1298 = vadd.f32 0.0, %v1297
      %v1299 = vpop.f32.mrb[0].mxu0
      %1300 = vdwg.mxu0
      %v1301 = vld [vmem:[%s452] sm:$0xff]
      %v1302 = vld [vmem:[%s452 + $0x8] sm:$0xff]
      %v1303 = vld [vmem:[%s452 + $0x10] sm:$0xff]
      %v1304 = vld [vmem:[%s452 + $0x18] sm:$0xff]
      %v1305 = vld [vmem:[%s452 + $0x20] sm:$0xff]
      %v1306 = vld [vmem:[%s452 + $0x28] sm:$0xff]
      %1308 = vset.pattern.permute.xlu0 0
      %1309 = vperm.xlu0 %1308, %v1301
      %v1310 = vpop.permute.xlu0 %1309
      %1313 = vset.pattern.permute.xlu0 0
      %1314 = vperm.xlu0 %1313, %v1302
      %v1315 = vpop.permute.xlu0 %1314
      %1318 = vset.pattern.permute.xlu0 0
      %1319 = vperm.xlu0 %1318, %v1303
      %v1320 = vpop.permute.xlu0 %1319
      %1323 = vset.pattern.permute.xlu0 0
      %1324 = vperm.xlu0 %1323, %v1304
      %v1325 = vpop.permute.xlu0 %1324
      %1328 = vset.pattern.permute.xlu0 0
      %1329 = vperm.xlu0 %1328, %v1305
      %v1330 = vpop.permute.xlu0 %1329
      %1333 = vset.pattern.permute.xlu0 0
      %1334 = vperm.xlu0 %1333, %v1306
      %v1335 = vpop.permute.xlu0 %1334
      %v1337 = vmul.f32 %v1279, %v1310
      %v1338 = vmul.f32 %v1282, %v1315
      %v1339 = vmul.f32 %v1287, %v1320
      %v1340 = vmul.f32 %v1290, %v1325
      %v1341 = vmul.f32 %v1295, %v1330
      %v1342 = vmul.f32 %v1298, %v1335
      %v1343 = vadd.f32 %v1337, %v1339
      %v1344 = vadd.f32 %v1338, %v1340
      %v1345 = vadd.f32 %v1343, %v1341
      %v1346 = vadd.f32 %v1344, %v1342
      %v1347 = vld [vmem:[%s502] sm:$0xff]
      %v1348 = vld [vmem:[%s502 + $0x8] sm:$0xff]
      %v1349 = vadd.f32 %v1347, %v1345
      %v1350 = vadd.f32 %v1348, %v1346
      %1351 = vst [vmem:[%s502] sm:$0xff] %v1349
      %1352 = vst [vmem:[%s502 + $0x8] sm:$0xff] %v1350
      %p1353 = scmp.lt.s32.totalorder %s22, 1
      %s1354 = scalar_select %p1353, %s22, 1
      %s1355 = smul.addr %s1354, 2
      %s1356 = smul.addr %s1355, 8
      %s1357 = scalar_lea.vmem %s7, %s1356
      // Predicated region
      $region53: #{_forward_core.1} parent=47 // pred_check
        %p1358 = pneg %p258
      $region54: #{_forward_core.1} parent=47 // pred_check_branch
        %1360 = sbr.rel (%p1358) target = $region56
      $region55: #{_forward_core.1} parent=47 // pred_region
        _
      $region56: #{_forward_core.1} parent=47 // pred_fallthru
        _
    $region48: #{_forward_core.1} parent=5 // pred_fallthru
      _
    %p1361 = scmp.le.s32.totalorder 2, %s13
    // Predicated region
    $region57: #{_forward_core.1} parent=5 // pred_check
      %p1362 = pneg %p1361
    $region58: #{_forward_core.1} parent=5 // pred_check_branch
      %1364 = sbr.rel (%p1362) target = $region60
    $region59: #{_forward_core.1} parent=5 // pred_region
      %s1365 = ssub.s32 %s13, 2
      // Predicated region
      $region61: #{_forward_core.1} parent=59 // pred_check
        %p1366 = pneg %p264
      $region62: #{_forward_core.1} parent=59 // pred_check_branch
        %1368 = sbr.rel (%p1366) target = $region64
      $region63: #{_forward_core.1} parent=59 // pred_region
        %p1369 = scmp.lt.s32.totalorder %s24, 1
        %s1370 = scalar_select %p1369, %s24, 1
        %s1371 = smul.addr %s1370, 2
        %s1372 = smul.addr %s1371, 8
        %s1373 = scalar_lea.vmem %s7, %s1372
      $region64: #{_forward_core.1} parent=59 // pred_fallthru
        _
    $region60: #{_forward_core.1} parent=5 // pred_fallthru
      _
  $region6: #{_forward_core.1} parent=0 // loop_footer
    %s17 = sadd.s32 1, %s13
  $region7: #{_forward_core.1} parent=0 // loop_footer_branch
    %12 = sbr.rel target = $region3
  $region8: #{_forward_core.1} parent=0 // loop_exit
    _

</llo_original>
